<compile_context>
chip_gen: v6e
topology: v6e:2x2x1
jax: 0.10.0
libtpu: 0.0.40
codegen_flags: <defaults>
</compile_context>

<pallas_src>
import jax
import jax.numpy as jnp
from jax.experimental import pallas as pl
from jax.experimental.pallas import tpu as pltpu

LN_EPS = 1e-5          # torch.nn.LayerNorm default
LANES = 128            # padded feature width (hidden and action dims)


def _round_up(x, m):
    return ((x + m - 1) // m) * m


def _cdiv(a, b):
    return -(-a // b)


# --------------------------------------------------------------------------
# Parameter packing: LN-affine folding + lane-dense, sublane-aligned slabs
# --------------------------------------------------------------------------
def pack_params(params, dtype=jnp.bfloat16):
    """Packs all Actor parameters into:
      * slab_w : (SP+256, 128) matrix slab in `dtype` (matmul operands)
      * vecs   : (8, 128) f32 bias slab (rows: b1, b2', b3')
    with the LayerNorm affine folded into the following Linear layer.
    """
    w1, b1, g1, be1 = params["w1"], params["b1"], params["g1"], params["be1"]
    w2, b2, g2, be2 = params["w2"], params["b2"], params["g2"], params["be2"]
    w3, b3 = params["w3"], params["b3"]

    S, H1 = w1.shape
    H2 = w2.shape[1]
    A = w3.shape[1]
    assert max(H1, H2, A) <= LANES, "feature dims must fit in one 128-lane tile"
    # Multiple of 16 keeps the in-slab row offsets aligned to bf16 sublane
    # packing (and trivially to f32's 8).
    SP = _round_up(S, 16)

    # Fold LayerNorm affine into the next Linear (f32 math, done once offline).
    w2f = w2 * g1.reshape(H1, 1)          # diag(g1) @ w2
    b2f = b2 + be1 @ w2
    w3f = w3 * g2.reshape(H2, 1)          # diag(g2) @ w3
    b3f = b3 + be2 @ w3

    def pad2(m, rows, cols):
        return jnp.pad(m, ((0, rows - m.shape[0]), (0, cols - m.shape[1])))

    slab_w = jnp.concatenate(
        [pad2(w1, SP, LANES),             # rows [0, SP)       cols >= H1 zero
         pad2(w2f, LANES, LANES),         # rows [SP, SP+128)  padded rows/cols zero
         pad2(w3f, LANES, LANES)],        # rows [SP+128, SP+256)
        axis=0).astype(dtype)

    vecs = jnp.concatenate(
        [pad2(v, 1, LANES) for v in (b1, b2f, b3f)], axis=0)
    vecs = pad2(vecs, 8, LANES).astype(jnp.float32)   # (8,128), rows 3..7 unused

    return {
        "slab_w": slab_w,
        "vecs": vecs,
        "log_std": params["log_std"],
        "dims": (S, SP, H1, H2, A),
    }


# --------------------------------------------------------------------------
# Kernel
# --------------------------------------------------------------------------
def _ln_no_affine(h, inv_n):
    # Padded lanes of h are exactly zero, so full-width sums equal the sums
    # over the real features; inv_n = 1/num_real_features (Python float).
    # One-pass var = E[h^2] - mu^2; guarded against tiny negative cancellation.
    s = jnp.sum(h, axis=-1, keepdims=True)
    s2 = jnp.sum(h * h, axis=-1, keepdims=True)
    mu = s * inv_n
    var = jnp.maximum(s2 * inv_n - mu * mu, 0.0)
    return (h - mu) * jax.lax.rsqrt(var + LN_EPS)


def _make_actor_kernel(SP, H1, H2, A, w_dtype):
    r_w2 = SP
    r_w3 = SP + LANES
    r_end = SP + 2 * LANES
    inv_h1 = 1.0 / float(H1)        # plain Python floats: no captured tracers
    inv_h2 = 1.0 / float(H2)

    def kernel(x_ref, w_ref, v_ref, mean_ref):
        x = x_ref[...]                       # (TILE_B, SP)  w_dtype
        w1 = w_ref[0:r_w2, :]
        w2 = w_ref[r_w2:r_w3, :]
        w3 = w_ref[r_w3:r_end, :]
        b1 = v_ref[0:1, :]                   # f32 biases (LN affine pre-folded)
        b2 = v_ref[1:2, :]
        b3 = v_ref[2:3, :]

        # Layer 1: Linear -> ReLU -> LayerNorm (normalize only; padded lanes
        # of h are zero, so the full-width LN sums are exact).
        h = jnp.dot(x, w1, preferred_element_type=jnp.float32) + b1
        h = jnp.maximum(h, 0.0)
        n = _ln_no_affine(h, inv_h1)
        # After normalize-only LN the padded lanes are nonzero, but the padded
        # rows of w2/w3 are zero, so the next matmuls ignore them.

        # Layer 2: Linear -> ReLU -> LayerNorm
        h = jnp.dot(n.astype(w_dtype), w2, preferred_element_type=jnp.float32) + b2
        h = jnp.maximum(h, 0.0)
        n = _ln_no_affine(h, inv_h2)

        # Output layer: Linear -> Tanh; store only the A real action lanes.
        out = jnp.dot(n.astype(w_dtype), w3, preferred_element_type=jnp.float32) + b3
        mean_ref[...] = jnp.tanh(out[:, :A])

    return kernel


# --------------------------------------------------------------------------
# Wrapper
# --------------------------------------------------------------------------
def _choose_tile_b(B):
    # Small batches: one minimal sublane-aligned tile.
    if B <= 256:
        return _round_up(max(B, 1), 16)
    # Mid/large batches: aim for ~8 grid steps (keeps both v7x TCs busy and
    # bounds batch-padding waste), capped at 2048 rows per tile; per-step
    # VMEM stays well under scoped limits on v5e/v6e/v7x.
    tile = _round_up(_cdiv(B, 8), 128)
    return min(max(tile, 128), 2048)


def actor_forward(x, packed):
    """Runs the Actor forward pass. Returns (continuous_action_mean,
    continuous_action_std) — the parameters of the Normal distribution.
    dist_discrete is None (num_discrete_actions=0)."""
    slab_w = packed["slab_w"]
    vecs = packed["vecs"]
    S, SP, H1, H2, A = packed["dims"]
    RW = slab_w.shape[0]

    B = x.shape[0]
    x = x.astype(slab_w.dtype)
    if SP != S:
        x = jnp.pad(x, ((0, 0), (0, SP - S)))

    TILE_B = _choose_tile_b(B)
    Bp = _round_up(B, TILE_B)
    if Bp != B:
        x = jnp.pad(x, ((0, Bp - B), (0, 0)))
    grid = (Bp // TILE_B,)

    kernel = _make_actor_kernel(SP, H1, H2, A, slab_w.dtype)

    mean_padded = pl.pallas_call(
        kernel,
        out_shape=jax.ShapeDtypeStruct((Bp, A), jnp.float32),
        grid_spec=pltpu.PrefetchScalarGridSpec(
            num_scalar_prefetch=0,
            grid=grid,
            in_specs=[
                pl.BlockSpec((TILE_B, SP), lambda i: (i, 0)),
                pl.BlockSpec((RW, LANES), lambda i: (0, 0)),   # resident weights
                pl.BlockSpec((8, LANES), lambda i: (0, 0)),    # resident biases
            ],
            out_specs=pl.BlockSpec((TILE_B, A), lambda i: (i, 0)),
        ),
        compiler_params=pltpu.CompilerParams(
            dimension_semantics=("parallel",)),
    )(x, slab_w, vecs)

    mean = mean_padded[:B] if Bp != B else mean_padded
    # std is independent of x: computed once in the wrapper, fuses into XLA.
    std = jnp.broadcast_to(jnp.exp(packed["log_std"]), mean.shape)
    return mean, std


# --------------------------------------------------------------------------
# Init + pure-JAX reference (validation)
# --------------------------------------------------------------------------
def init_params(key, num_states, num_actions, num_hiddens=(64, 64),
                action_log_std=0.0):
    """PyTorch-like nn.Linear init (uniform(-1/sqrt(fan_in), 1/sqrt(fan_in)));
    LayerNorm weight=1, bias=0. Weights stored as (in, out)."""
    dims = [num_states] + list(num_hiddens) + [num_actions]
    params = {}
    keys = jax.random.split(key, 2 * (len(dims) - 1))
    names = [("w1", "b1"), ("w2", "b2"), ("w3", "b3")]
    for i, (wn, bn) in enumerate(names):
        fan_in, fan_out = dims[i], dims[i + 1]
        bound = 1.0 / jnp.sqrt(jnp.float32(fan_in))
        params[wn] = jax.random.uniform(keys[2 * i], (fan_in, fan_out),
                                        jnp.float32, -bound, bound)
        params[bn] = jax.random.uniform(keys[2 * i + 1], (1, fan_out),
                                        jnp.float32, -bound, bound)
    params["g1"] = jnp.ones((1, num_hiddens[0]), jnp.float32)
    params["be1"] = jnp.zeros((1, num_hiddens[0]), jnp.float32)
    params["g2"] = jnp.ones((1, num_hiddens[1]), jnp.float32)
    params["be2"] = jnp.zeros((1, num_hiddens[1]), jnp.float32)
    params["log_std"] = jnp.full((1, num_actions), action_log_std, jnp.float32)
    return params


def _layernorm_ref(h, gamma, beta):
    mu = jnp.mean(h, axis=-1, keepdims=True)
    var = jnp.mean((h - mu) * (h - mu), axis=-1, keepdims=True)
    return (h - mu) * jax.lax.rsqrt(var + LN_EPS) * gamma + beta


def actor_forward_ref(x, params):
    h = x @ params["w1"] + params["b1"]
    h = jnp.maximum(h, 0.0)
    h = _layernorm_ref(h, params["g1"], params["be1"])
    h = h @ params["w2"] + params["b2"]
    h = jnp.maximum(h, 0.0)
    h = _layernorm_ref(h, params["g2"], params["be2"])
    out = h @ params["w3"] + params["b3"]
    mean = jnp.tanh(out)
    std = jnp.broadcast_to(jnp.exp(params["log_std"]), mean.shape)
    return mean, std


if __name__ == "__main__":
    num_states = 32
    num_actions = 8
    batch = 8

    key = jax.random.PRNGKey(0)
    pkey, xkey = jax.random.split(key)
    params = init_params(pkey, num_states, num_actions)
    x = jax.random.normal(xkey, (batch, num_states), dtype=jnp.float32)

    mean_ref, std_ref = actor_forward_ref(x, params)

    # f32 matmul operands: tight check (validates fusion + LN-affine folding).
    packed_f32 = pack_params(params, dtype=jnp.float32)
    mean32, std32 = actor_forward(x, packed_f32)
    jax.block_until_ready((mean32, std32))
    assert mean32.shape == (batch, num_actions)
    assert std32.shape == (batch, num_actions)
    assert jnp.allclose(mean32, mean_ref, atol=2e-5, rtol=1e-5)
    assert jnp.allclose(std32, std_ref, atol=1e-6, rtol=1e-6)

    # Default fast path: bf16 matmul operands, f32 elementwise math.
    packed_bf16 = pack_params(params, dtype=jnp.bfloat16)
    mean16, std16 = actor_forward(x, packed_bf16)
    jax.block_until_ready((mean16, std16))
    assert mean16.shape == (batch, num_actions)
    assert jnp.allclose(mean16, mean_ref, atol=5e-2, rtol=0.0)
    assert jnp.allclose(std16, std_ref, atol=1e-6, rtol=1e-6)

    # dist_discrete is None (default num_discrete_actions=0);
    # Normal(mean, std) is fully described by (mean, std).
    print("KERNEL_OK")
</pallas_src>

<mosaic_0001>
module attributes {stable_mosaic.version = 11 : i64} {
  func.func @kernel(%arg0: i32, %arg1: memref<16x32xf32, #tpu.memory_space<vmem>>, %arg2: memref<288x128xf32, #tpu.memory_space<vmem>>, %arg3: memref<8x128xf32, #tpu.memory_space<vmem>>, %arg4: memref<16x8xf32, #tpu.memory_space<vmem>>) attributes {dimension_semantics = [#tpu.dimension_semantics<parallel>], iteration_bounds = array<i64: 1>, scalar_prefetch = 0 : i64, scratch_operands = 0 : i64, tpu.core_type = #tpu.core_type<tc>, window_params = [{transform_indices = @transform_0, window_bounds = array<i64: 16, 32>}, {pipeline_mode = #tpu.pipeline_mode<synchronous>, transform_indices = @transform_1, window_bounds = array<i64: 288, 128>}, {pipeline_mode = #tpu.pipeline_mode<synchronous>, transform_indices = @transform_2, window_bounds = array<i64: 8, 128>}, {transform_indices = @transform_3, window_bounds = array<i64: 16, 8>}]} {
    %c0 = arith.constant 0 : index
    %c0_0 = arith.constant 0 : index
    %0 = vector.load %arg1[%c0, %c0_0] : memref<16x32xf32, #tpu.memory_space<vmem>>, vector<16x32xf32>
    %c0_1 = arith.constant 0 : index
    %c0_2 = arith.constant 0 : index
    %1 = vector.load %arg2[%c0_1, %c0_2] : memref<288x128xf32, #tpu.memory_space<vmem>>, vector<32x128xf32>
    %c32 = arith.constant 32 : index
    %c0_3 = arith.constant 0 : index
    %2 = vector.load %arg2[%c32, %c0_3] : memref<288x128xf32, #tpu.memory_space<vmem>>, vector<128x128xf32>
    %c160 = arith.constant 160 : index
    %c0_4 = arith.constant 0 : index
    %3 = vector.load %arg2[%c160, %c0_4] : memref<288x128xf32, #tpu.memory_space<vmem>>, vector<128x128xf32>
    %c0_5 = arith.constant 0 : index
    %c0_6 = arith.constant 0 : index
    %4 = vector.load %arg3[%c0_5, %c0_6] : memref<8x128xf32, #tpu.memory_space<vmem>>, vector<1x128xf32>
    %c1 = arith.constant 1 : index
    %c0_7 = arith.constant 0 : index
    %5 = vector.load %arg3[%c1, %c0_7] : memref<8x128xf32, #tpu.memory_space<vmem>>, vector<1x128xf32>
    %c2 = arith.constant 2 : index
    %c0_8 = arith.constant 0 : index
    %6 = vector.load %arg3[%c2, %c0_8] : memref<8x128xf32, #tpu.memory_space<vmem>>, vector<1x128xf32>
    %cst = arith.constant dense<0.000000e+00> : vector<16x128xf32>
    %7 = tpu.matmul %0, %1, %cst {dimension_numbers = #tpu.dot_dimension_numbers<[1], [0], [0], [1], [0, 0, 1, 1], [], []>} : vector<16x32xf32>, vector<32x128xf32>, vector<16x128xf32> -> vector<16x128xf32>
    %8 = vector.broadcast %4 : vector<1x128xf32> to vector<16x128xf32>
    %9 = arith.addf %7, %8 : vector<16x128xf32>
    %cst_9 = arith.constant 0.000000e+00 : f32
    %10 = vector.broadcast %cst_9 : f32 to vector<16x128xf32>
    %11 = arith.maximumf %9, %10 : vector<16x128xf32>
    %cst_10 = arith.constant dense<0.000000e+00> : vector<16xf32>
    %12 = vector.multi_reduction <add>, %11, %cst_10 [1] : vector<16x128xf32> to vector<16xf32>
    %13 = vector.shape_cast %12 : vector<16xf32> to vector<16x1xf32>
    %14 = arith.mulf %11, %11 : vector<16x128xf32>
    %cst_11 = arith.constant dense<0.000000e+00> : vector<16xf32>
    %15 = vector.multi_reduction <add>, %14, %cst_11 [1] : vector<16x128xf32> to vector<16xf32>
    %16 = vector.shape_cast %15 : vector<16xf32> to vector<16x1xf32>
    %cst_12 = arith.constant 1.562500e-02 : f32
    %17 = vector.broadcast %cst_12 : f32 to vector<16x1xf32>
    %18 = arith.mulf %13, %17 : vector<16x1xf32>
    %cst_13 = arith.constant 1.562500e-02 : f32
    %19 = vector.broadcast %cst_13 : f32 to vector<16x1xf32>
    %20 = arith.mulf %16, %19 : vector<16x1xf32>
    %21 = arith.mulf %18, %18 : vector<16x1xf32>
    %22 = arith.subf %20, %21 : vector<16x1xf32>
    %cst_14 = arith.constant 0.000000e+00 : f32
    %23 = vector.broadcast %cst_14 : f32 to vector<16x1xf32>
    %24 = arith.maximumf %22, %23 : vector<16x1xf32>
    %25 = vector.broadcast %18 : vector<16x1xf32> to vector<16x128xf32>
    %26 = arith.subf %11, %25 : vector<16x128xf32>
    %cst_15 = arith.constant 9.99999974E-6 : f32
    %27 = vector.broadcast %cst_15 : f32 to vector<16x1xf32>
    %28 = arith.addf %24, %27 : vector<16x1xf32>
    %29 = math.rsqrt %28 : vector<16x1xf32>
    %30 = vector.broadcast %29 : vector<16x1xf32> to vector<16x128xf32>
    %31 = arith.mulf %26, %30 : vector<16x128xf32>
    %cst_16 = arith.constant dense<0.000000e+00> : vector<16x128xf32>
    %32 = tpu.matmul %31, %2, %cst_16 {dimension_numbers = #tpu.dot_dimension_numbers<[1], [0], [0], [1], [0, 0, 1, 1], [], []>} : vector<16x128xf32>, vector<128x128xf32>, vector<16x128xf32> -> vector<16x128xf32>
    %33 = vector.broadcast %5 : vector<1x128xf32> to vector<16x128xf32>
    %34 = arith.addf %32, %33 : vector<16x128xf32>
    %cst_17 = arith.constant 0.000000e+00 : f32
    %35 = vector.broadcast %cst_17 : f32 to vector<16x128xf32>
    %36 = arith.maximumf %34, %35 : vector<16x128xf32>
    %cst_18 = arith.constant dense<0.000000e+00> : vector<16xf32>
    %37 = vector.multi_reduction <add>, %36, %cst_18 [1] : vector<16x128xf32> to vector<16xf32>
    %38 = vector.shape_cast %37 : vector<16xf32> to vector<16x1xf32>
    %39 = arith.mulf %36, %36 : vector<16x128xf32>
    %cst_19 = arith.constant dense<0.000000e+00> : vector<16xf32>
    %40 = vector.multi_reduction <add>, %39, %cst_19 [1] : vector<16x128xf32> to vector<16xf32>
    %41 = vector.shape_cast %40 : vector<16xf32> to vector<16x1xf32>
    %cst_20 = arith.constant 1.562500e-02 : f32
    %42 = vector.broadcast %cst_20 : f32 to vector<16x1xf32>
    %43 = arith.mulf %38, %42 : vector<16x1xf32>
    %cst_21 = arith.constant 1.562500e-02 : f32
    %44 = vector.broadcast %cst_21 : f32 to vector<16x1xf32>
    %45 = arith.mulf %41, %44 : vector<16x1xf32>
    %46 = arith.mulf %43, %43 : vector<16x1xf32>
    %47 = arith.subf %45, %46 : vector<16x1xf32>
    %cst_22 = arith.constant 0.000000e+00 : f32
    %48 = vector.broadcast %cst_22 : f32 to vector<16x1xf32>
    %49 = arith.maximumf %47, %48 : vector<16x1xf32>
    %50 = vector.broadcast %43 : vector<16x1xf32> to vector<16x128xf32>
    %51 = arith.subf %36, %50 : vector<16x128xf32>
    %cst_23 = arith.constant 9.99999974E-6 : f32
    %52 = vector.broadcast %cst_23 : f32 to vector<16x1xf32>
    %53 = arith.addf %49, %52 : vector<16x1xf32>
    %54 = math.rsqrt %53 : vector<16x1xf32>
    %55 = vector.broadcast %54 : vector<16x1xf32> to vector<16x128xf32>
    %56 = arith.mulf %51, %55 : vector<16x128xf32>
    %cst_24 = arith.constant dense<0.000000e+00> : vector<16x128xf32>
    %57 = tpu.matmul %56, %3, %cst_24 {dimension_numbers = #tpu.dot_dimension_numbers<[1], [0], [0], [1], [0, 0, 1, 1], [], []>} : vector<16x128xf32>, vector<128x128xf32>, vector<16x128xf32> -> vector<16x128xf32>
    %58 = vector.broadcast %6 : vector<1x128xf32> to vector<16x128xf32>
    %59 = arith.addf %57, %58 : vector<16x128xf32>
    %60 = vector.extract_strided_slice %59 {offsets = [0, 0], sizes = [16, 8], strides = [1, 1]} : vector<16x128xf32> to vector<16x8xf32>
    %61 = math.tanh %60 : vector<16x8xf32>
    %c0_25 = arith.constant 0 : index
    %c0_26 = arith.constant 0 : index
    %62 = vector.load %arg4[%c0_25, %c0_26] : memref<16x8xf32, #tpu.memory_space<vmem>>, vector<16x8xf32>
    tpu.vector_store %arg4[%c0_25, %c0_26], %61 {strides = array<i32>} : memref<16x8xf32, #tpu.memory_space<vmem>>, vector<16x8xf32>,
    return
  }
  func.func @transform_0(%arg0: i32) -> (i32, i32) {
    %c0_i32 = arith.constant 0 : i32
    %c0_i32_0 = arith.constant 0 : i32
    return %arg0, %c0_i32 : i32, i32
  }
  func.func @transform_1(%arg0: i32) -> (i32, i32) {
    %c0_i32 = arith.constant 0 : i32
    %c0_i32_0 = arith.constant 0 : i32
    %c0_i32_1 = arith.constant 0 : i32
    return %c0_i32, %c0_i32_0 : i32, i32
  }
  func.func @transform_2(%arg0: i32) -> (i32, i32) {
    %c0_i32 = arith.constant 0 : i32
    %c0_i32_0 = arith.constant 0 : i32
    %c0_i32_1 = arith.constant 0 : i32
    return %c0_i32, %c0_i32_0 : i32, i32
  }
  func.func @transform_3(%arg0: i32) -> (i32, i32) {
    %c0_i32 = arith.constant 0 : i32
    %c0_i32_0 = arith.constant 0 : i32
    return %arg0, %c0_i32 : i32, i32
  }
}

</mosaic_0001>

<llo_original>
// kernel: tpu_custom_call.1
$region0: #{tpu_custom_call.1}
  #allocation0 [shape = 'u32[]', space=smem, size = 0x4, offset = 0x4, fixed_abs, tag = 'smem constant byte address 0x4 - core index']
  #allocation1 [shape = 'u32[144,128]{1,0:T(1,128)}', space=vmem, size = 0x12000, scoped, tag = 'internal scratch']
  %s0 = inlined_call_operand.hbm [shape: f32[16,32], index: 0, kind: input, shape index: {}]
  %s1 = inlined_call_operand.hbm [shape: f32[288,128], index: 1, kind: input, shape index: {}]
  %s2 = inlined_call_operand.hbm [shape: f32[8,128], index: 2, kind: input, shape index: {}]
  %s3 = inlined_call_operand.vmem [shape: f32[16,8], index: 3, kind: output, shape index: {}]
  %s4 = sld [smem:[#allocation0]]
  $region34: #{tpu_custom_call.1} parent=0
    _
  %s6 = ssub.s32 1, %s4
  %s7 = scalar_select 0, %s6, %s4
  $region1: #{tpu_custom_call.1} parent=0
    #allocation2 [shape = 'u8[8192]{0}', space=vmem, size = 0x2000, scoped, tag = 'input window, operand 0, single buffered']
    #allocation3 [shape = 's32[1]{0}', space=sflag, size = 0x4, scoped, tag = 'scoped memory for tpu_custom_call.1']
    #allocation4 [shape = 'u8[147456]{0}', space=vmem, size = 0x24000, scoped, tag = 'input window, operand 1, single buffered']
    #allocation5 [shape = 's32[1]{0}', space=sflag, size = 0x4, scoped, tag = 'scoped memory for tpu_custom_call.1']
    #allocation6 [shape = 'u8[4096]{0}', space=vmem, size = 0x1000, scoped, tag = 'input window, operand 2, single buffered']
    %8 = vsyncpa [#allocation3], 0
    %9 = vsyncpa [#allocation5], 0
    // Predicated region
    $region2: #{tpu_custom_call.1} parent=1 // pred_check
      _
    $region3: #{tpu_custom_call.1} parent=1 // pred_check_branch
      %11 = sbr.rel (0) target = $region5
    $region4: #{tpu_custom_call.1} parent=1 // pred_region
      %s13 = ssub.s32 256, 256
      %14 = vsyncadd [#allocation3], %s13
      %s15 = sshll.u32 [#allocation2], 4
      %s16 = int_to_ptr.vmem [resolvable:$true] %s15
      %21 = dma.hbm_to_vmem [thread:$0]  %s0, 256, %s16, [#allocation3], 128, 128, 8
    $region5: #{tpu_custom_call.1} parent=1 // pred_fallthru
      _
    // Predicated region
    $region6: #{tpu_custom_call.1} parent=1 // pred_check
      _
    $region7: #{tpu_custom_call.1} parent=1 // pred_check_branch
      %23 = sbr.rel (0) target = $region9
    $region8: #{tpu_custom_call.1} parent=1 // pred_region
      %s25 = ssub.s32 4608, 4608
      %26 = vsyncadd [#allocation5], %s25
      %s27 = sshll.u32 [#allocation4], 4
      %s28 = int_to_ptr.vmem [resolvable:$true] %s27
      %33 = dma.hbm_to_vmem [thread:$0]  %s1, 4608, %s28, [#allocation5], 128, 128, 8
    $region9: #{tpu_custom_call.1} parent=1 // pred_fallthru
      _
    // Predicated region
    $region10: #{tpu_custom_call.1} parent=1 // pred_check
      _
    $region11: #{tpu_custom_call.1} parent=1 // pred_check_branch
      %35 = sbr.rel (0) target = $region13
    $region12: #{tpu_custom_call.1} parent=1 // pred_region
      %s37 = ssub.s32 128, 128
      %38 = vsyncadd [#allocation5], %s37
      %s40 = sshll.u32 [#allocation6], 4
      %s41 = int_to_ptr.vmem [resolvable:$true] %s40
      %43 = dma.hbm_to_vmem [thread:$0]  %s2, 128, %s41, [#allocation5]
    $region13: #{tpu_custom_call.1} parent=1 // pred_fallthru
      _
    // Predicated region
    $region14: #{tpu_custom_call.1} parent=1 // pred_check
      _
    $region15: #{tpu_custom_call.1} parent=1 // pred_check_branch
      %45 = sbr.rel (0) target = $region17
    $region16: #{tpu_custom_call.1} parent=1 // pred_region
      %46 = dma.done [#allocation3], 256
    $region17: #{tpu_custom_call.1} parent=1 // pred_fallthru
      _
    // Predicated region
    $region18: #{tpu_custom_call.1} parent=1 // pred_check
      _
    $region19: #{tpu_custom_call.1} parent=1 // pred_check_branch
      %48 = sbr.rel (0) target = $region21
    $region20: #{tpu_custom_call.1} parent=1 // pred_region
      %49 = dma.done [#allocation5], 4608
    $region21: #{tpu_custom_call.1} parent=1 // pred_fallthru
      _
    // Predicated region
    $region22: #{tpu_custom_call.1} parent=1 // pred_check
      _
    $region23: #{tpu_custom_call.1} parent=1 // pred_check_branch
      %51 = sbr.rel (0) target = $region25
    $region24: #{tpu_custom_call.1} parent=1 // pred_region
      %52 = dma.done [#allocation5], 128
    $region25: #{tpu_custom_call.1} parent=1 // pred_fallthru
      _
    %v53 = vld [vmem:[#allocation2] sm:$0xff]
    %v54 = vld [vmem:[#allocation2 + $0x8] sm:$0xff]
    %v55 = vld [vmem:[#allocation4] sm:$0xff]
    %v56 = vld [vmem:[#allocation4 + $0x8] sm:$0xff]
    %v57 = vld [vmem:[#allocation4 + $0x10] sm:$0xff]
    %v58 = vld [vmem:[#allocation4 + $0x18] sm:$0xff]
    %v59 = vld [vmem:[#allocation4 + $0x20] sm:$0xff]
    %v60 = vld [vmem:[#allocation4 + $0x28] sm:$0xff]
    %v61 = vld [vmem:[#allocation4 + $0x30] sm:$0xff]
    %v62 = vld [vmem:[#allocation4 + $0x38] sm:$0xff]
    %v63 = vld [vmem:[#allocation4 + $0x40] sm:$0xff]
    %v64 = vld [vmem:[#allocation4 + $0x48] sm:$0xff]
    %v65 = vld [vmem:[#allocation4 + $0x50] sm:$0xff]
    %v66 = vld [vmem:[#allocation4 + $0x58] sm:$0xff]
    %v67 = vld [vmem:[#allocation4 + $0x60] sm:$0xff]
    %v68 = vld [vmem:[#allocation4 + $0x68] sm:$0xff]
    %v69 = vld [vmem:[#allocation4 + $0x70] sm:$0xff]
    %v70 = vld [vmem:[#allocation4 + $0x78] sm:$0xff]
    %v71 = vld [vmem:[#allocation4 + $0x80] sm:$0xff]
    %v72 = vld [vmem:[#allocation4 + $0x88] sm:$0xff]
    %v73 = vld [vmem:[#allocation4 + $0x90] sm:$0xff]
    %v74 = vld [vmem:[#allocation4 + $0x98] sm:$0xff]
    %v75 = vld [vmem:[#allocation4 + $0xa0] sm:$0xff]
    %v76 = vld [vmem:[#allocation4 + $0xa8] sm:$0xff]
    %v77 = vld [vmem:[#allocation4 + $0xb0] sm:$0xff]
    %v78 = vld [vmem:[#allocation4 + $0xb8] sm:$0xff]
    %v79 = vld [vmem:[#allocation4 + $0xc0] sm:$0xff]
    %v80 = vld [vmem:[#allocation4 + $0xc8] sm:$0xff]
    %v81 = vld [vmem:[#allocation4 + $0xd0] sm:$0xff]
    %v82 = vld [vmem:[#allocation4 + $0xd8] sm:$0xff]
    %v83 = vld [vmem:[#allocation4 + $0xe0] sm:$0xff]
    %v84 = vld [vmem:[#allocation4 + $0xe8] sm:$0xff]
    %v85 = vld [vmem:[#allocation4 + $0xf0] sm:$0xff]
    %v86 = vld [vmem:[#allocation4 + $0xf8] sm:$0xff]
    %v87 = vld [vmem:[#allocation4 + $0x100] sm:$0xff]
    %v88 = vld [vmem:[#allocation4 + $0x108] sm:$0xff]
    %v89 = vld [vmem:[#allocation4 + $0x110] sm:$0xff]
    %v90 = vld [vmem:[#allocation4 + $0x118] sm:$0xff]
    %v91 = vld [vmem:[#allocation6] sm:$0x1]
    %v92 = vld [vmem:[#allocation6 + $0x1] sm:$0x1]
    %v93 = vld [vmem:[#allocation6 + $0x2] sm:$0x1]
    %v94 = vlaneseq
    %v95 = vshrl.u32 %v94, 7
    %v96 = vsub.s32 0, %v95
    %v97 = vrot.slane %v91, %v96
    %vm98 = vcmask 261120
    %v100 = vsel %vm98, %v53, 0
    %v103 = vsel %vm98, %v54, 0
    %105 = vmatprep.subr.mxu0 0.0
    %106 = vmatpush1.msra.mxu0 0.0
    %107 = vmatprep.subr.mxu0 0.0
    %108 = vmatpush1.msra.mxu0 0.0
    %109 = vmatprep.subr.mxu0 0.0
    %110 = vmatpush1.msra.mxu0 0.0
    %111 = vmatprep.subr.mxu0 0.0
    %112 = vmatpush1.msra.mxu0 0.0
    %113 = vmatprep.subr.mxu0 0.0
    %114 = vmatpush1.msra.mxu0 0.0
    %115 = vmatprep.subr.mxu0 0.0
    %116 = vmatpush1.msra.mxu0 0.0
    %117 = vmatprep.subr.mxu0 0.0
    %118 = vmatpush1.msra.mxu0 0.0
    %119 = vmatprep.subr.mxu0 0.0
    %120 = vmatpush1.msra.mxu0 0.0
    %121 = vmatprep.subr.mxu0 0.0
    %122 = vmatpush1.msra.mxu0 0.0
    %123 = vmatprep.subr.mxu0 0.0
    %124 = vmatpush1.msra.mxu0 0.0
    %125 = vmatprep.subr.mxu0 0.0
    %126 = vmatpush1.msra.mxu0 0.0
    %127 = vmatprep.subr.mxu0 0.0
    %128 = vmatpush1.msra.mxu0 0.0
    %129 = vmatprep.subr.mxu0 0.0
    %130 = vmatpush1.msra.mxu0 %v58
    %131 = vmatprep.subr.mxu0 0.0
    %132 = vmatpush1.msra.mxu0 %v57
    %133 = vmatprep.subr.mxu0 0.0
    %134 = vmatpush1.msra.mxu0 %v56
    %135 = vmatprep.subr.mxu0 0.0
    %136 = vmatpush1.msra.mxu0 %v55
    %137 = vmatprep.subr.mxu0 0.0
    %138 = vmatpush2.msra.mxu0 0.0
    %139 = vmatprep.subr.mxu0 0.0
    %140 = vmatpush2.msra.mxu0 0.0
    %141 = vmatprep.subr.mxu0 0.0
    %142 = vmatpush2.msra.mxu0 0.0
    %143 = vmatprep.subr.mxu0 0.0
    %144 = vmatpush2.msra.mxu0 0.0
    %145 = vmatprep.subr.mxu0 0.0
    %146 = vmatpush2.msra.mxu0 0.0
    %147 = vmatprep.subr.mxu0 0.0
    %148 = vmatpush2.msra.mxu0 0.0
    %149 = vmatprep.subr.mxu0 0.0
    %150 = vmatpush2.msra.mxu0 0.0
    %151 = vmatprep.subr.mxu0 0.0
    %152 = vmatpush2.msra.mxu0 0.0
    %153 = vmatprep.subr.mxu0 0.0
    %154 = vmatpush2.msra.mxu0 0.0
    %155 = vmatprep.subr.mxu0 0.0
    %156 = vmatpush2.msra.mxu0 0.0
    %157 = vmatprep.subr.mxu0 0.0
    %158 = vmatpush2.msra.mxu0 0.0
    %159 = vmatprep.subr.mxu0 0.0
    %160 = vmatpush2.msra.mxu0 0.0
    %161 = vmatprep.subr.mxu0 0.0
    %162 = vmatpush2.msra.mxu0 0.0
    %163 = vmatprep.subr.mxu0 0.0
    %164 = vmatpush2.msra.mxu0 0.0
    %165 = vmatprep.subr.mxu0 0.0
    %166 = vmatpush2.msra.mxu0 0.0
    %167 = vmatprep.subr.mxu0 0.0
    %168 = vmatpush2.msra.mxu0 0.0
    %169 = vmatprep.mubr.f32.mxu0 0.0
    %170 = vmatmul.mubr.f32.gmra.mxu0 %v100
    %v171 = vpop.f32.mrf.mxu0
    %v172 = vadd.f32 %v97, %v171
    %v173 = vpop.f32.mrf.mxu0
    %174 = vmatprep.mubr.f32.mxu0 0.0
    %175 = vmatmul.mubr.f32.gmra.mxu0 %v103
    %v176 = vpop.f32.mrf.mxu0
    %v177 = vadd.f32 %v97, %v176
    %v178 = vpop.f32.mrf.mxu0
    %179 = vdwg.mxu0
    %v180 = vmax.f32 %v172, 0.0
    %v181 = vmax.f32 %v177, 0.0
    %182 = vadd.xlane.f32.xlu0 %v180
    %v183 = vpop.xlane.xlu0 %182
    %184 = vadd.xlane.f32.xlu0 %v181
    %v185 = vpop.xlane.xlu0 %184
    %v186 = vmul.f32 %v180, %v180
    %v187 = vmul.f32 %v181, %v181
    %188 = vadd.xlane.f32.xlu0 %v186
    %v189 = vpop.xlane.xlu0 %188
    %190 = vadd.xlane.f32.xlu0 %v187
    %v191 = vpop.xlane.xlu0 %190
    %v192 = vmul.f32 %v183, 0.015625
    %v193 = vmul.f32 %v185, 0.015625
    %v194 = vmul.f32 %v189, 0.015625
    %v195 = vmul.f32 %v191, 0.015625
    %v196 = vmul.f32 %v192, %v192
    %v197 = vmul.f32 %v193, %v193
    %v198 = vsub.f32 %v194, %v196
    %v199 = vsub.f32 %v195, %v197
    %v200 = vmax.f32 %v198, 0.0
    %v201 = vmax.f32 %v199, 0.0
    %v202 = vsub.f32 %v180, %v192
    %v203 = vsub.f32 %v181, %v193
    %v204 = vadd.f32 %v200, 1e-05
    %v205 = vadd.f32 %v201, 1e-05
    %v206 = vrsqrt.pop %v204
    %v207 = vrsqrt.pop %v205
    %v208 = vmul.f32 %v202, %v206
    %v209 = vmul.f32 %v203, %v207
    %v210 = vlaneseq
    %v211 = vshrl.u32 %v210, 7
    %v212 = vsub.s32 0, %v211
    %v213 = vrot.slane %v92, %v212
    %214 = vmatprep.subr.mxu0 0.0
    %215 = vmatpush1.msra.mxu0 %v74
    %216 = vmatprep.subr.mxu0 0.0
    %217 = vmatpush1.msra.mxu0 %v73
    %218 = vmatprep.subr.mxu0 0.0
    %219 = vmatpush1.msra.mxu0 %v72
    %220 = vmatprep.subr.mxu0 0.0
    %221 = vmatpush1.msra.mxu0 %v71
    %222 = vmatprep.subr.mxu0 0.0
    %223 = vmatpush1.msra.mxu0 %v70
    %224 = vmatprep.subr.mxu0 0.0
    %225 = vmatpush1.msra.mxu0 %v69
    %226 = vmatprep.subr.mxu0 0.0
    %227 = vmatpush1.msra.mxu0 %v68
    %228 = vmatprep.subr.mxu0 0.0
    %229 = vmatpush1.msra.mxu0 %v67
    %230 = vmatprep.subr.mxu0 0.0
    %231 = vmatpush1.msra.mxu0 %v66
    %232 = vmatprep.subr.mxu0 0.0
    %233 = vmatpush1.msra.mxu0 %v65
    %234 = vmatprep.subr.mxu0 0.0
    %235 = vmatpush1.msra.mxu0 %v64
    %236 = vmatprep.subr.mxu0 0.0
    %237 = vmatpush1.msra.mxu0 %v63
    %238 = vmatprep.subr.mxu0 0.0
    %239 = vmatpush1.msra.mxu0 %v62
    %240 = vmatprep.subr.mxu0 0.0
    %241 = vmatpush1.msra.mxu0 %v61
    %242 = vmatprep.subr.mxu0 0.0
    %243 = vmatpush1.msra.mxu0 %v60
    %244 = vmatprep.subr.mxu0 0.0
    %245 = vmatpush1.msra.mxu0 %v59
    %246 = vmatprep.subr.mxu0 0.0
    %247 = vmatpush2.msra.mxu0 0.0
    %248 = vmatprep.subr.mxu0 0.0
    %249 = vmatpush2.msra.mxu0 0.0
    %250 = vmatprep.subr.mxu0 0.0
    %251 = vmatpush2.msra.mxu0 0.0
    %252 = vmatprep.subr.mxu0 0.0
    %253 = vmatpush2.msra.mxu0 0.0
    %254 = vmatprep.subr.mxu0 0.0
    %255 = vmatpush2.msra.mxu0 0.0
    %256 = vmatprep.subr.mxu0 0.0
    %257 = vmatpush2.msra.mxu0 0.0
    %258 = vmatprep.subr.mxu0 0.0
    %259 = vmatpush2.msra.mxu0 0.0
    %260 = vmatprep.subr.mxu0 0.0
    %261 = vmatpush2.msra.mxu0 0.0
    %262 = vmatprep.subr.mxu0 0.0
    %263 = vmatpush2.msra.mxu0 0.0
    %264 = vmatprep.subr.mxu0 0.0
    %265 = vmatpush2.msra.mxu0 0.0
    %266 = vmatprep.subr.mxu0 0.0
    %267 = vmatpush2.msra.mxu0 0.0
    %268 = vmatprep.subr.mxu0 0.0
    %269 = vmatpush2.msra.mxu0 0.0
    %270 = vmatprep.subr.mxu0 0.0
    %271 = vmatpush2.msra.mxu0 0.0
    %272 = vmatprep.subr.mxu0 0.0
    %273 = vmatpush2.msra.mxu0 0.0
    %274 = vmatprep.subr.mxu0 0.0
    %275 = vmatpush2.msra.mxu0 0.0
    %276 = vmatprep.subr.mxu0 0.0
    %277 = vmatpush2.msra.mxu0 0.0
    %278 = vmatprep.mubr.f32.mxu0 0.0
    %279 = vmatmul.mubr.f32.gmra.mxu0 %v208
    %v280 = vpop.f32.mrf.mxu0
    %v281 = vadd.f32 %v213, %v280
    %v282 = vpop.f32.mrf.mxu0
    %283 = vmatprep.mubr.f32.mxu0 0.0
    %284 = vmatmul.mubr.f32.gmra.mxu0 %v209
    %v285 = vpop.f32.mrf.mxu0
    %v286 = vadd.f32 %v213, %v285
    %v287 = vpop.f32.mrf.mxu0
    %288 = vdwg.mxu0
    %v289 = vmax.f32 %v281, 0.0
    %v290 = vmax.f32 %v286, 0.0
    %291 = vadd.xlane.f32.xlu0 %v289
    %v292 = vpop.xlane.xlu0 %291
    %293 = vadd.xlane.f32.xlu0 %v290
    %v294 = vpop.xlane.xlu0 %293
    %v295 = vmul.f32 %v289, %v289
    %v296 = vmul.f32 %v290, %v290
    %297 = vadd.xlane.f32.xlu0 %v295
    %v298 = vpop.xlane.xlu0 %297
    %299 = vadd.xlane.f32.xlu0 %v296
    %v300 = vpop.xlane.xlu0 %299
    %v301 = vmul.f32 %v292, 0.015625
    %v302 = vmul.f32 %v294, 0.015625
    %v303 = vmul.f32 %v298, 0.015625
    %v304 = vmul.f32 %v300, 0.015625
    %v305 = vmul.f32 %v301, %v301
    %v306 = vmul.f32 %v302, %v302
    %v307 = vsub.f32 %v303, %v305
    %v308 = vsub.f32 %v304, %v306
    %v309 = vmax.f32 %v307, 0.0
    %v310 = vmax.f32 %v308, 0.0
    %v311 = vsub.f32 %v289, %v301
    %v312 = vsub.f32 %v290, %v302
    %v313 = vadd.f32 %v309, 1e-05
    %v314 = vadd.f32 %v310, 1e-05
    %v315 = vrsqrt.pop %v313
    %v316 = vrsqrt.pop %v314
    %v317 = vmul.f32 %v311, %v315
    %v318 = vmul.f32 %v312, %v316
    %v319 = vlaneseq
    %v320 = vshrl.u32 %v319, 7
    %v321 = vsub.s32 0, %v320
    %v322 = vrot.slane %v93, %v321
    %323 = vmatprep.subr.mxu0 0.0
    %324 = vmatpush1.msra.mxu0 %v90
    %325 = vmatprep.subr.mxu0 0.0
    %326 = vmatpush1.msra.mxu0 %v89
    %327 = vmatprep.subr.mxu0 0.0
    %328 = vmatpush1.msra.mxu0 %v88
    %329 = vmatprep.subr.mxu0 0.0
    %330 = vmatpush1.msra.mxu0 %v87
    %331 = vmatprep.subr.mxu0 0.0
    %332 = vmatpush1.msra.mxu0 %v86
    %333 = vmatprep.subr.mxu0 0.0
    %334 = vmatpush1.msra.mxu0 %v85
    %335 = vmatprep.subr.mxu0 0.0
    %336 = vmatpush1.msra.mxu0 %v84
    %337 = vmatprep.subr.mxu0 0.0
    %338 = vmatpush1.msra.mxu0 %v83
    %339 = vmatprep.subr.mxu0 0.0
    %340 = vmatpush1.msra.mxu0 %v82
    %341 = vmatprep.subr.mxu0 0.0
    %342 = vmatpush1.msra.mxu0 %v81
    %343 = vmatprep.subr.mxu0 0.0
    %344 = vmatpush1.msra.mxu0 %v80
    %345 = vmatprep.subr.mxu0 0.0
    %346 = vmatpush1.msra.mxu0 %v79
    %347 = vmatprep.subr.mxu0 0.0
    %348 = vmatpush1.msra.mxu0 %v78
    %349 = vmatprep.subr.mxu0 0.0
    %350 = vmatpush1.msra.mxu0 %v77
    %351 = vmatprep.subr.mxu0 0.0
    %352 = vmatpush1.msra.mxu0 %v76
    %353 = vmatprep.subr.mxu0 0.0
    %354 = vmatpush1.msra.mxu0 %v75
    %355 = vmatprep.subr.mxu0 0.0
    %356 = vmatpush2.msra.mxu0 0.0
    %357 = vmatprep.subr.mxu0 0.0
    %358 = vmatpush2.msra.mxu0 0.0
    %359 = vmatprep.subr.mxu0 0.0
    %360 = vmatpush2.msra.mxu0 0.0
    %361 = vmatprep.subr.mxu0 0.0
    %362 = vmatpush2.msra.mxu0 0.0
    %363 = vmatprep.subr.mxu0 0.0
    %364 = vmatpush2.msra.mxu0 0.0
    %365 = vmatprep.subr.mxu0 0.0
    %366 = vmatpush2.msra.mxu0 0.0
    %367 = vmatprep.subr.mxu0 0.0
    %368 = vmatpush2.msra.mxu0 0.0
    %369 = vmatprep.subr.mxu0 0.0
    %370 = vmatpush2.msra.mxu0 0.0
    %371 = vmatprep.subr.mxu0 0.0
    %372 = vmatpush2.msra.mxu0 0.0
    %373 = vmatprep.subr.mxu0 0.0
    %374 = vmatpush2.msra.mxu0 0.0
    %375 = vmatprep.subr.mxu0 0.0
    %376 = vmatpush2.msra.mxu0 0.0
    %377 = vmatprep.subr.mxu0 0.0
    %378 = vmatpush2.msra.mxu0 0.0
    %379 = vmatprep.subr.mxu0 0.0
    %380 = vmatpush2.msra.mxu0 0.0
    %381 = vmatprep.subr.mxu0 0.0
    %382 = vmatpush2.msra.mxu0 0.0
    %383 = vmatprep.subr.mxu0 0.0
    %384 = vmatpush2.msra.mxu0 0.0
    %385 = vmatprep.subr.mxu0 0.0
    %386 = vmatpush2.msra.mxu0 0.0
    %387 = vmatprep.mubr.f32.mxu0 0.0
    %388 = vmatmul.mubr.f32.gmra.mxu0 %v317
    %v389 = vpop.f32.mrf.mxu0
    %v390 = vadd.f32 %v322, %v389
    %v391 = vpop.f32.mrf.mxu0
    %392 = vmatprep.mubr.f32.mxu0 0.0
    %393 = vmatmul.mubr.f32.gmra.mxu0 %v318
    %v394 = vpop.f32.mrf.mxu0
    %v395 = vadd.f32 %v322, %v394
    %v396 = vpop.f32.mrf.mxu0
    %397 = vdwg.mxu0
    %v398 = vtanh.pop %v390
    %v399 = vtanh.pop %v395
    %vm400 = vcmask 64512
    %401 = vst.msk [vmem:[%s3] sm:$0xff] %vm400, %v398
    %402 = vst.msk [vmem:[%s3 + $0x8] sm:$0xff] %vm400, %v399
    // Predicated region
    $region26: #{tpu_custom_call.1} parent=1 // pred_check
      _
    $region27: #{tpu_custom_call.1} parent=1 // pred_check_branch
      %404 = sbr.rel (0) target = $region29
    $region28: #{tpu_custom_call.1} parent=1 // pred_region
      _
    $region29: #{tpu_custom_call.1} parent=1 // pred_fallthru
      _
    // Predicated region
    $region30: #{tpu_custom_call.1} parent=1 // pred_check
      _
    $region31: #{tpu_custom_call.1} parent=1 // pred_check_branch
      %406 = sbr.rel (0) target = $region33
    $region32: #{tpu_custom_call.1} parent=1 // pred_region
      _
    $region33: #{tpu_custom_call.1} parent=1 // pred_fallthru
      _
    %407 = vsyncpa [#allocation3], 1
    %408 = vsyncpa [#allocation5], 1

</llo_original>
